<compile_context>
chip_gen: v7x
topology: tpu7x:2x2x1
jax: 0.10.0
libtpu: 0.0.40
codegen_flags: <defaults>
</compile_context>

<pallas_src>
import jax
import jax.numpy as jnp
from jax.experimental import pallas as pl
from jax.experimental.pallas import tpu as pltpu

STATE_DIM = 6        # Acrobot-v1 observation space
ACTION_DIM = 3       # Acrobot-v1 action space
HIDDEN = 128

PAD_IN = 8           # 6 state features + 1 bias column, padded to sublane (8)
PAD_OUT = 128        # lane-dense output (ACTION_DIM=3 -> 128)
BIAS_COL = STATE_DIM # column of ones that folds fc1's bias into W1
MAX_TILE_B = 256     # single step for typical replay batches; parallel tiles above


def _round_up(n, m):
    return ((n + m - 1) // m) * m


def _dqn_kernel(x_ref, w1_ref, w2_ref, b2_ref, w3_ref, b3_ref, o_ref):
    """Fused 3-layer MLP on one batch tile.

    h1 = relu(x @ W1)            (fc1 bias folded into W1 via ones column)
    h2 = relu(h1 @ W2 + b2)
    o  = h2 @ W3 + b3
    """
    h1 = jnp.maximum(
        jnp.dot(x_ref[...], w1_ref[...], preferred_element_type=jnp.float32), 0.0
    )
    h2 = jnp.maximum(
        jnp.dot(h1, w2_ref[...], preferred_element_type=jnp.float32) + b2_ref[...],
        0.0,
    )
    o_ref[...] = (
        jnp.dot(h2, w3_ref[...], preferred_element_type=jnp.float32) + b3_ref[...]
    )


def pack_params(params):
    """One-time packing of nn.Linear-style params into kernel layout.

    params: (w1, b1, w2, b2, w3, b3) with w_i shaped (in_features, out_features).
    Returns padded, device-resident arrays; call once, reuse every step.
    """
    w1, b1, w2, b2, w3, b3 = params
    w1_p = jnp.zeros((PAD_IN, HIDDEN), jnp.float32)
    w1_p = w1_p.at[:STATE_DIM, :].set(w1)
    w1_p = w1_p.at[BIAS_COL, :].set(b1)               # fc1 bias folded into W1
    w2_p = jnp.asarray(w2, jnp.float32)
    b2_p = jnp.asarray(b2, jnp.float32).reshape(1, HIDDEN)
    w3_p = jnp.zeros((HIDDEN, PAD_OUT), jnp.float32).at[:, :ACTION_DIM].set(w3)
    b3_p = jnp.zeros((1, PAD_OUT), jnp.float32).at[:, :ACTION_DIM].set(b3)
    return (w1_p, w2_p, b2_p, w3_p, b3_p)


def dqn_forward(x, packed):
    """x: (B, STATE_DIM) float32 -> (B, ACTION_DIM) float32."""
    w1_p, w2_p, b2_p, w3_p, b3_p = packed
    B = x.shape[0]

    # Batch tiling: batches <= MAX_TILE_B run as a single grid step (padded
    # only to the sublane multiple of 8); larger batches tile in MAX_TILE_B
    # rows over a "parallel" grid (megacore splits tiles on v7x).
    tile_b = MAX_TILE_B if B >= MAX_TILE_B else _round_up(B, 8)
    b_pad = _round_up(B, tile_b)
    grid = (b_pad // tile_b,)

    # Per-call activation padding (weights are pre-packed once).
    x_p = jnp.zeros((b_pad, PAD_IN), jnp.float32)
    x_p = x_p.at[:B, :STATE_DIM].set(x)
    x_p = x_p.at[:B, BIAS_COL].set(1.0)               # ones column -> fc1 bias

    resident = lambda shape: pl.BlockSpec(shape, lambda i: (0, 0))
    out = pl.pallas_call(
        _dqn_kernel,
        out_shape=jax.ShapeDtypeStruct((b_pad, PAD_OUT), jnp.float32),
        grid=grid,
        in_specs=[
            pl.BlockSpec((tile_b, PAD_IN), lambda i: (i, 0)),   # x tiles
            resident((PAD_IN, HIDDEN)),                         # W1 (+b1)
            resident((HIDDEN, HIDDEN)),                         # W2
            resident((1, HIDDEN)),                              # b2
            resident((HIDDEN, PAD_OUT)),                        # W3
            resident((1, PAD_OUT)),                             # b3
        ],
        out_specs=pl.BlockSpec((tile_b, PAD_OUT), lambda i: (i, 0)),
        compiler_params=pltpu.CompilerParams(
            dimension_semantics=("parallel",)
        ),
    )(x_p, w1_p, w2_p, b2_p, w3_p, b3_p)

    return out[:B, :ACTION_DIM]


dqn_forward = jax.jit(dqn_forward)


def init_params(key):
    """Deterministic init mirroring nn.Linear (uniform +/- 1/sqrt(fan_in)).

    Weights are returned already transposed to (in_features, out_features).
    """
    def linear(key, fan_in, fan_out):
        kw, kb = jax.random.split(key)
        bound = 1.0 / jnp.sqrt(fan_in)
        w = jax.random.uniform(kw, (fan_in, fan_out), jnp.float32, -bound, bound)
        b = jax.random.uniform(kb, (fan_out,), jnp.float32, -bound, bound)
        return w, b

    k1, k2, k3 = jax.random.split(key, 3)
    w1, b1 = linear(k1, STATE_DIM, HIDDEN)
    w2, b2 = linear(k2, HIDDEN, HIDDEN)
    w3, b3 = linear(k3, HIDDEN, ACTION_DIM)
    return (w1, b1, w2, b2, w3, b3)


def reference_forward(x, params):
    w1, b1, w2, b2, w3, b3 = params
    h1 = jnp.maximum(x @ w1 + b1, 0.0)
    h2 = jnp.maximum(h1 @ w2 + b2, 0.0)
    return h2 @ w3 + b3


if __name__ == "__main__":
    key = jax.random.PRNGKey(0)
    kp, kx_small, kx_mid, kx_big = jax.random.split(key, 4)
    params = init_params(kp)
    packed = pack_params(params)   # one-time weight packing (hoisted off hot path)

    # Small "act()"-style batch.
    x_small = jax.random.normal(kx_small, (2, STATE_DIM), jnp.float32)
    out_small = jax.block_until_ready(dqn_forward(x_small, packed))
    ref_small = reference_forward(x_small, params)
    assert out_small.shape == (2, ACTION_DIM), out_small.shape
    assert jnp.allclose(out_small, ref_small, atol=1e-4, rtol=1e-4)

    # Typical replay-buffer batch (single grid step, non-multiple of 8).
    x_mid = jax.random.normal(kx_mid, (200, STATE_DIM), jnp.float32)
    out_mid = jax.block_until_ready(dqn_forward(x_mid, packed))
    ref_mid = reference_forward(x_mid, params)
    assert out_mid.shape == (200, ACTION_DIM), out_mid.shape
    assert jnp.allclose(out_mid, ref_mid, atol=1e-4, rtol=1e-4)

    # Large batch exercising the parallel batch grid (non-multiple of tile).
    x_big = jax.random.normal(kx_big, (700, STATE_DIM), jnp.float32)
    out_big = jax.block_until_ready(dqn_forward(x_big, packed))
    ref_big = reference_forward(x_big, params)
    assert out_big.shape == (700, ACTION_DIM), out_big.shape
    assert jnp.allclose(out_big, ref_big, atol=1e-4, rtol=1e-4)

    print("KERNEL_OK")
</pallas_src>

<mosaic_0001>
module attributes {stable_mosaic.version = 11 : i64} {
  func.func @_dqn_kernel(%arg0: i32, %arg1: memref<8x8xf32, #tpu.memory_space<vmem>>, %arg2: memref<8x128xf32, #tpu.memory_space<vmem>>, %arg3: memref<128x128xf32, #tpu.memory_space<vmem>>, %arg4: memref<1x128xf32, #tpu.memory_space<vmem>>, %arg5: memref<128x128xf32, #tpu.memory_space<vmem>>, %arg6: memref<1x128xf32, #tpu.memory_space<vmem>>, %arg7: memref<8x128xf32, #tpu.memory_space<vmem>>) attributes {dimension_semantics = [#tpu.dimension_semantics<parallel>], iteration_bounds = array<i64: 1>, scalar_prefetch = 0 : i64, scratch_operands = 0 : i64, tpu.core_type = #tpu.core_type<tc>, window_params = [{transform_indices = @transform_0, window_bounds = array<i64: 8, 8>}, {pipeline_mode = #tpu.pipeline_mode<synchronous>, transform_indices = @transform_1, window_bounds = array<i64: 8, 128>}, {pipeline_mode = #tpu.pipeline_mode<synchronous>, transform_indices = @transform_2, window_bounds = array<i64: 128, 128>}, {pipeline_mode = #tpu.pipeline_mode<synchronous>, transform_indices = @transform_3, window_bounds = array<i64: 1, 128>}, {pipeline_mode = #tpu.pipeline_mode<synchronous>, transform_indices = @transform_4, window_bounds = array<i64: 128, 128>}, {pipeline_mode = #tpu.pipeline_mode<synchronous>, transform_indices = @transform_5, window_bounds = array<i64: 1, 128>}, {transform_indices = @transform_6, window_bounds = array<i64: 8, 128>}]} {
    %c0 = arith.constant 0 : index
    %c0_0 = arith.constant 0 : index
    %0 = vector.load %arg1[%c0, %c0_0] : memref<8x8xf32, #tpu.memory_space<vmem>>, vector<8x8xf32>
    %c0_1 = arith.constant 0 : index
    %c0_2 = arith.constant 0 : index
    %1 = vector.load %arg2[%c0_1, %c0_2] : memref<8x128xf32, #tpu.memory_space<vmem>>, vector<8x128xf32>
    %cst = arith.constant dense<0.000000e+00> : vector<8x128xf32>
    %2 = tpu.matmul %0, %1, %cst {dimension_numbers = #tpu.dot_dimension_numbers<[1], [0], [0], [1], [0, 0, 1, 1], [], []>} : vector<8x8xf32>, vector<8x128xf32>, vector<8x128xf32> -> vector<8x128xf32>
    %cst_3 = arith.constant 0.000000e+00 : f32
    %3 = vector.broadcast %cst_3 : f32 to vector<8x128xf32>
    %4 = arith.maximumf %2, %3 : vector<8x128xf32>
    %c0_4 = arith.constant 0 : index
    %c0_5 = arith.constant 0 : index
    %5 = vector.load %arg3[%c0_4, %c0_5] : memref<128x128xf32, #tpu.memory_space<vmem>>, vector<128x128xf32>
    %cst_6 = arith.constant dense<0.000000e+00> : vector<8x128xf32>
    %6 = tpu.matmul %4, %5, %cst_6 {dimension_numbers = #tpu.dot_dimension_numbers<[1], [0], [0], [1], [0, 0, 1, 1], [], []>} : vector<8x128xf32>, vector<128x128xf32>, vector<8x128xf32> -> vector<8x128xf32>
    %c0_7 = arith.constant 0 : index
    %c0_8 = arith.constant 0 : index
    %7 = vector.load %arg4[%c0_7, %c0_8] : memref<1x128xf32, #tpu.memory_space<vmem>>, vector<1x128xf32>
    %8 = vector.broadcast %7 : vector<1x128xf32> to vector<8x128xf32>
    %9 = arith.addf %6, %8 : vector<8x128xf32>
    %cst_9 = arith.constant 0.000000e+00 : f32
    %10 = vector.broadcast %cst_9 : f32 to vector<8x128xf32>
    %11 = arith.maximumf %9, %10 : vector<8x128xf32>
    %c0_10 = arith.constant 0 : index
    %c0_11 = arith.constant 0 : index
    %12 = vector.load %arg5[%c0_10, %c0_11] : memref<128x128xf32, #tpu.memory_space<vmem>>, vector<128x128xf32>
    %cst_12 = arith.constant dense<0.000000e+00> : vector<8x128xf32>
    %13 = tpu.matmul %11, %12, %cst_12 {dimension_numbers = #tpu.dot_dimension_numbers<[1], [0], [0], [1], [0, 0, 1, 1], [], []>} : vector<8x128xf32>, vector<128x128xf32>, vector<8x128xf32> -> vector<8x128xf32>
    %c0_13 = arith.constant 0 : index
    %c0_14 = arith.constant 0 : index
    %14 = vector.load %arg6[%c0_13, %c0_14] : memref<1x128xf32, #tpu.memory_space<vmem>>, vector<1x128xf32>
    %15 = vector.broadcast %14 : vector<1x128xf32> to vector<8x128xf32>
    %16 = arith.addf %13, %15 : vector<8x128xf32>
    %c0_15 = arith.constant 0 : index
    %c0_16 = arith.constant 0 : index
    %17 = vector.load %arg7[%c0_15, %c0_16] : memref<8x128xf32, #tpu.memory_space<vmem>>, vector<8x128xf32>
    tpu.vector_store %arg7[%c0_15, %c0_16], %16 {strides = array<i32>} : memref<8x128xf32, #tpu.memory_space<vmem>>, vector<8x128xf32>,
    return
  }
  func.func @transform_0(%arg0: i32) -> (i32, i32) {
    %c0_i32 = arith.constant 0 : i32
    %c0_i32_0 = arith.constant 0 : i32
    return %arg0, %c0_i32 : i32, i32
  }
  func.func @transform_1(%arg0: i32) -> (i32, i32) {
    %c0_i32 = arith.constant 0 : i32
    %c0_i32_0 = arith.constant 0 : i32
    %c0_i32_1 = arith.constant 0 : i32
    return %c0_i32, %c0_i32_0 : i32, i32
  }
  func.func @transform_2(%arg0: i32) -> (i32, i32) {
    %c0_i32 = arith.constant 0 : i32
    %c0_i32_0 = arith.constant 0 : i32
    %c0_i32_1 = arith.constant 0 : i32
    return %c0_i32, %c0_i32_0 : i32, i32
  }
  func.func @transform_3(%arg0: i32) -> (i32, i32) {
    %c0_i32 = arith.constant 0 : i32
    %c0_i32_0 = arith.constant 0 : i32
    %c0_i32_1 = arith.constant 0 : i32
    return %c0_i32, %c0_i32_0 : i32, i32
  }
  func.func @transform_4(%arg0: i32) -> (i32, i32) {
    %c0_i32 = arith.constant 0 : i32
    %c0_i32_0 = arith.constant 0 : i32
    %c0_i32_1 = arith.constant 0 : i32
    return %c0_i32, %c0_i32_0 : i32, i32
  }
  func.func @transform_5(%arg0: i32) -> (i32, i32) {
    %c0_i32 = arith.constant 0 : i32
    %c0_i32_0 = arith.constant 0 : i32
    %c0_i32_1 = arith.constant 0 : i32
    return %c0_i32, %c0_i32_0 : i32, i32
  }
  func.func @transform_6(%arg0: i32) -> (i32, i32) {
    %c0_i32 = arith.constant 0 : i32
    %c0_i32_0 = arith.constant 0 : i32
    return %arg0, %c0_i32 : i32, i32
  }
}

</mosaic_0001>

<llo_original>
// kernel: dqn_forward.1
$region0: #{dqn_forward.1}
  #allocation0 [shape = 'u32[]', space=smem, size = 0x4, offset = 0x4, fixed_abs, tag = 'smem constant byte address 0x4 - core index']
  #allocation1 [shape = 'u32[144,128]{1,0:T(1,128)}', space=vmem, size = 0x12000, scoped, tag = 'internal scratch']
  %s0 = inlined_call_operand.vmem [shape: f32[8,8], index: 0, kind: input, shape index: {}]
  %s1 = inlined_call_operand.vmem [shape: f32[8,128], index: 1, kind: input, shape index: {}]
  %s2 = inlined_call_operand.hbm [shape: f32[128,128], index: 2, kind: input, shape index: {}]
  %s3 = inlined_call_operand.vmem [shape: f32[1,128], index: 3, kind: input, shape index: {}]
  %s4 = inlined_call_operand.hbm [shape: f32[128,128], index: 4, kind: input, shape index: {}]
  %s5 = inlined_call_operand.vmem [shape: f32[1,128], index: 5, kind: input, shape index: {}]
  %s6 = inlined_call_operand.vmem [shape: f32[8,128], index: 6, kind: output, shape index: {}]
  %s7 = sld [smem:[#allocation0]]
  $region42: #{dqn_forward.1} parent=0
    _
  %s9 = ssub.s32 1, %s7
  %s10 = scalar_select 0, %s9, %s7
  $region1: #{dqn_forward.1} parent=0
    #allocation2 [shape = 'u8[65536]{0}', space=vmem, size = 0x10000, scoped, tag = 'input window, operand 2, single buffered']
    #allocation3 [shape = 's32[1]{0}', space=sflag, size = 0x4, scoped, tag = 'scoped memory for dqn_forward.1']
    #allocation4 [shape = 'u8[65536]{0}', space=vmem, size = 0x10000, scoped, tag = 'input window, operand 4, single buffered']
    #allocation5 [shape = 's32[1]{0}', space=sflag, size = 0x4, scoped, tag = 'scoped memory for dqn_forward.1']
    %11 = vsyncpa [#allocation3], 0
    %12 = vsyncpa [#allocation5], 0
    // Predicated region
    $region2: #{dqn_forward.1} parent=1 // pred_check
      _
    $region3: #{dqn_forward.1} parent=1 // pred_check_branch
      %14 = sbr.rel (0) target = $region5
    $region4: #{dqn_forward.1} parent=1 // pred_region
      _
    $region5: #{dqn_forward.1} parent=1 // pred_fallthru
      _
    // Predicated region
    $region6: #{dqn_forward.1} parent=1 // pred_check
      _
    $region7: #{dqn_forward.1} parent=1 // pred_check_branch
      %16 = sbr.rel (0) target = $region9
    $region8: #{dqn_forward.1} parent=1 // pred_region
      _
    $region9: #{dqn_forward.1} parent=1 // pred_fallthru
      _
    // Predicated region
    $region10: #{dqn_forward.1} parent=1 // pred_check
      _
    $region11: #{dqn_forward.1} parent=1 // pred_check_branch
      %18 = sbr.rel (0) target = $region13
    $region12: #{dqn_forward.1} parent=1 // pred_region
      %s20 = ssub.s32 2048, 2048
      %21 = vsyncadd [#allocation3], %s20
      %s22 = sshll.u32 [#allocation2], 4
      %s23 = int_to_ptr.vmem [resolvable:$true] %s22
      %28 = dma.hbm_to_vmem [thread:$0]  %s2, 2048, %s23, [#allocation3], 128, 128, 8
    $region13: #{dqn_forward.1} parent=1 // pred_fallthru
      _
    // Predicated region
    $region14: #{dqn_forward.1} parent=1 // pred_check
      _
    $region15: #{dqn_forward.1} parent=1 // pred_check_branch
      %30 = sbr.rel (0) target = $region17
    $region16: #{dqn_forward.1} parent=1 // pred_region
      _
    $region17: #{dqn_forward.1} parent=1 // pred_fallthru
      _
    // Predicated region
    $region18: #{dqn_forward.1} parent=1 // pred_check
      _
    $region19: #{dqn_forward.1} parent=1 // pred_check_branch
      %32 = sbr.rel (0) target = $region21
    $region20: #{dqn_forward.1} parent=1 // pred_region
      %s34 = ssub.s32 2048, 2048
      %35 = vsyncadd [#allocation5], %s34
      %s36 = sshll.u32 [#allocation4], 4
      %s37 = int_to_ptr.vmem [resolvable:$true] %s36
      %42 = dma.hbm_to_vmem [thread:$0]  %s4, 2048, %s37, [#allocation5], 128, 128, 8
    $region21: #{dqn_forward.1} parent=1 // pred_fallthru
      _
    // Predicated region
    $region22: #{dqn_forward.1} parent=1 // pred_check
      _
    $region23: #{dqn_forward.1} parent=1 // pred_check_branch
      %44 = sbr.rel (0) target = $region25
    $region24: #{dqn_forward.1} parent=1 // pred_region
      _
    $region25: #{dqn_forward.1} parent=1 // pred_fallthru
      _
    // Predicated region
    $region26: #{dqn_forward.1} parent=1 // pred_check
      _
    $region27: #{dqn_forward.1} parent=1 // pred_check_branch
      %46 = sbr.rel (0) target = $region29
    $region28: #{dqn_forward.1} parent=1 // pred_region
      %47 = dma.done [#allocation3], 2048
    $region29: #{dqn_forward.1} parent=1 // pred_fallthru
      _
    // Predicated region
    $region30: #{dqn_forward.1} parent=1 // pred_check
      _
    $region31: #{dqn_forward.1} parent=1 // pred_check_branch
      %49 = sbr.rel (0) target = $region33
    $region32: #{dqn_forward.1} parent=1 // pred_region
      %50 = dma.done [#allocation5], 2048
    $region33: #{dqn_forward.1} parent=1 // pred_fallthru
      _
    %v51 = vld [vmem:[%s0] sm:$0xff]
    %v52 = vld [vmem:[%s1] sm:$0xff]
    %vm53 = vcmask 64512
    %v55 = vsel %vm53, %v51, 0
    %57 = vmatprep.subr.mxu0 0.0
    %58 = vmatpush1.msra.mxu0 %v52
    %59 = vmatprep.subr.mxu0 0.0
    %60 = vmatpush1.msra.mxu0 0.0
    %61 = vmatprep.subr.mxu0 0.0
    %62 = vmatpush1.msra.mxu0 0.0
    %63 = vmatprep.subr.mxu0 0.0
    %64 = vmatpush1.msra.mxu0 0.0
    %65 = vmatprep.subr.mxu0 0.0
    %66 = vmatpush1.msra.mxu0 0.0
    %67 = vmatprep.subr.mxu0 0.0
    %68 = vmatpush1.msra.mxu0 0.0
    %69 = vmatprep.subr.mxu0 0.0
    %70 = vmatpush1.msra.mxu0 0.0
    %71 = vmatprep.subr.mxu0 0.0
    %72 = vmatpush1.msra.mxu0 0.0
    %73 = vmatprep.subr.mxu0 0.0
    %74 = vmatpush1.msra.mxu0 0.0
    %75 = vmatprep.subr.mxu0 0.0
    %76 = vmatpush1.msra.mxu0 0.0
    %77 = vmatprep.subr.mxu0 0.0
    %78 = vmatpush1.msra.mxu0 0.0
    %79 = vmatprep.subr.mxu0 0.0
    %80 = vmatpush1.msra.mxu0 0.0
    %81 = vmatprep.subr.mxu0 0.0
    %82 = vmatpush1.msra.mxu0 0.0
    %83 = vmatprep.subr.mxu0 0.0
    %84 = vmatpush1.msra.mxu0 0.0
    %85 = vmatprep.subr.mxu0 0.0
    %86 = vmatpush1.msra.mxu0 0.0
    %87 = vmatprep.subr.mxu0 0.0
    %88 = vmatpush1.msra.mxu0 0.0
    %89 = vmatprep.subr.mxu0 0.0
    %90 = vmatpush1.msra.mxu0 0.0
    %91 = vmatprep.subr.mxu0 0.0
    %92 = vmatpush1.msra.mxu0 0.0
    %93 = vmatprep.subr.mxu0 0.0
    %94 = vmatpush1.msra.mxu0 0.0
    %95 = vmatprep.subr.mxu0 0.0
    %96 = vmatpush1.msra.mxu0 0.0
    %97 = vmatprep.subr.mxu0 0.0
    %98 = vmatpush1.msra.mxu0 0.0
    %99 = vmatprep.subr.mxu0 0.0
    %100 = vmatpush1.msra.mxu0 0.0
    %101 = vmatprep.subr.mxu0 0.0
    %102 = vmatpush1.msra.mxu0 0.0
    %103 = vmatprep.subr.mxu0 0.0
    %104 = vmatpush1.msra.mxu0 0.0
    %105 = vmatprep.subr.mxu0 0.0
    %106 = vmatpush1.msra.mxu0 0.0
    %107 = vmatprep.subr.mxu0 0.0
    %108 = vmatpush1.msra.mxu0 0.0
    %109 = vmatprep.subr.mxu0 0.0
    %110 = vmatpush1.msra.mxu0 0.0
    %111 = vmatprep.subr.mxu0 0.0
    %112 = vmatpush1.msra.mxu0 0.0
    %113 = vmatprep.subr.mxu0 0.0
    %114 = vmatpush1.msra.mxu0 0.0
    %115 = vmatprep.subr.mxu0 0.0
    %116 = vmatpush1.msra.mxu0 0.0
    %117 = vmatprep.subr.mxu0 0.0
    %118 = vmatpush1.msra.mxu0 0.0
    %119 = vmatprep.subr.mxu0 0.0
    %120 = vmatpush1.msra.mxu0 0.0
    %121 = vmatprep.mubr.f32.mxu0 0.0
    %122 = vmatmul.mubr.f32.gmra.mrb[0].mxu0 %v55
    %v123 = vpop.f32.mrb[0].mxu0
    %v124 = vadd.f32 0.0, %v123
    %v125 = vpop.f32.mrb[0].mxu0
    %126 = vdwg.mxu0
    %v127 = vmax.f32 %v124, 0.0
    %v128 = vld [vmem:[#allocation2] sm:$0xff]
    %v129 = vld [vmem:[#allocation2 + $0x8] sm:$0xff]
    %v130 = vld [vmem:[#allocation2 + $0x10] sm:$0xff]
    %v131 = vld [vmem:[#allocation2 + $0x18] sm:$0xff]
    %v132 = vld [vmem:[#allocation2 + $0x20] sm:$0xff]
    %v133 = vld [vmem:[#allocation2 + $0x28] sm:$0xff]
    %v134 = vld [vmem:[#allocation2 + $0x30] sm:$0xff]
    %v135 = vld [vmem:[#allocation2 + $0x38] sm:$0xff]
    %v136 = vld [vmem:[#allocation2 + $0x40] sm:$0xff]
    %v137 = vld [vmem:[#allocation2 + $0x48] sm:$0xff]
    %v138 = vld [vmem:[#allocation2 + $0x50] sm:$0xff]
    %v139 = vld [vmem:[#allocation2 + $0x58] sm:$0xff]
    %v140 = vld [vmem:[#allocation2 + $0x60] sm:$0xff]
    %v141 = vld [vmem:[#allocation2 + $0x68] sm:$0xff]
    %v142 = vld [vmem:[#allocation2 + $0x70] sm:$0xff]
    %v143 = vld [vmem:[#allocation2 + $0x78] sm:$0xff]
    %v144 = vld [vmem:[%s3] sm:$0x1]
    %v146 = vlaneseq
    %v147 = vshrl.u32 %v146, 7
    %v148 = vsub.s32 0, %v147
    %v149 = vrot.slane %v144, %v148
    %151 = vmatprep.subr.mxu0 0.0
    %152 = vmatpush1.msra.mxu0 %v128
    %153 = vmatprep.subr.mxu0 0.0
    %154 = vmatpush1.msra.mxu0 %v129
    %155 = vmatprep.subr.mxu0 0.0
    %156 = vmatpush1.msra.mxu0 %v130
    %157 = vmatprep.subr.mxu0 0.0
    %158 = vmatpush1.msra.mxu0 %v131
    %159 = vmatprep.subr.mxu0 0.0
    %160 = vmatpush1.msra.mxu0 %v132
    %161 = vmatprep.subr.mxu0 0.0
    %162 = vmatpush1.msra.mxu0 %v133
    %163 = vmatprep.subr.mxu0 0.0
    %164 = vmatpush1.msra.mxu0 %v134
    %165 = vmatprep.subr.mxu0 0.0
    %166 = vmatpush1.msra.mxu0 %v135
    %167 = vmatprep.subr.mxu0 0.0
    %168 = vmatpush1.msra.mxu0 %v136
    %169 = vmatprep.subr.mxu0 0.0
    %170 = vmatpush1.msra.mxu0 %v137
    %171 = vmatprep.subr.mxu0 0.0
    %172 = vmatpush1.msra.mxu0 %v138
    %173 = vmatprep.subr.mxu0 0.0
    %174 = vmatpush1.msra.mxu0 %v139
    %175 = vmatprep.subr.mxu0 0.0
    %176 = vmatpush1.msra.mxu0 %v140
    %177 = vmatprep.subr.mxu0 0.0
    %178 = vmatpush1.msra.mxu0 %v141
    %179 = vmatprep.subr.mxu0 0.0
    %180 = vmatpush1.msra.mxu0 %v142
    %181 = vmatprep.subr.mxu0 0.0
    %182 = vmatpush1.msra.mxu0 %v143
    %183 = vmatprep.subr.mxu0 0.0
    %184 = vmatpush1.msra.mxu0 0.0
    %185 = vmatprep.subr.mxu0 0.0
    %186 = vmatpush1.msra.mxu0 0.0
    %187 = vmatprep.subr.mxu0 0.0
    %188 = vmatpush1.msra.mxu0 0.0
    %189 = vmatprep.subr.mxu0 0.0
    %190 = vmatpush1.msra.mxu0 0.0
    %191 = vmatprep.subr.mxu0 0.0
    %192 = vmatpush1.msra.mxu0 0.0
    %193 = vmatprep.subr.mxu0 0.0
    %194 = vmatpush1.msra.mxu0 0.0
    %195 = vmatprep.subr.mxu0 0.0
    %196 = vmatpush1.msra.mxu0 0.0
    %197 = vmatprep.subr.mxu0 0.0
    %198 = vmatpush1.msra.mxu0 0.0
    %199 = vmatprep.subr.mxu0 0.0
    %200 = vmatpush1.msra.mxu0 0.0
    %201 = vmatprep.subr.mxu0 0.0
    %202 = vmatpush1.msra.mxu0 0.0
    %203 = vmatprep.subr.mxu0 0.0
    %204 = vmatpush1.msra.mxu0 0.0
    %205 = vmatprep.subr.mxu0 0.0
    %206 = vmatpush1.msra.mxu0 0.0
    %207 = vmatprep.subr.mxu0 0.0
    %208 = vmatpush1.msra.mxu0 0.0
    %209 = vmatprep.subr.mxu0 0.0
    %210 = vmatpush1.msra.mxu0 0.0
    %211 = vmatprep.subr.mxu0 0.0
    %212 = vmatpush1.msra.mxu0 0.0
    %213 = vmatprep.subr.mxu0 0.0
    %214 = vmatpush1.msra.mxu0 0.0
    %215 = vmatprep.mubr.f32.mxu0 0.0
    %216 = vmatmul.mubr.f32.gmra.mrb[0].mxu0 %v127
    %v217 = vpop.f32.mrb[0].mxu0
    %v218 = vadd.f32 %v149, %v217
    %v219 = vpop.f32.mrb[0].mxu0
    %220 = vdwg.mxu0
    %v221 = vmax.f32 %v218, 0.0
    %v222 = vld [vmem:[#allocation4] sm:$0xff]
    %v223 = vld [vmem:[#allocation4 + $0x8] sm:$0xff]
    %v224 = vld [vmem:[#allocation4 + $0x10] sm:$0xff]
    %v225 = vld [vmem:[#allocation4 + $0x18] sm:$0xff]
    %v226 = vld [vmem:[#allocation4 + $0x20] sm:$0xff]
    %v227 = vld [vmem:[#allocation4 + $0x28] sm:$0xff]
    %v228 = vld [vmem:[#allocation4 + $0x30] sm:$0xff]
    %v229 = vld [vmem:[#allocation4 + $0x38] sm:$0xff]
    %v230 = vld [vmem:[#allocation4 + $0x40] sm:$0xff]
    %v231 = vld [vmem:[#allocation4 + $0x48] sm:$0xff]
    %v232 = vld [vmem:[#allocation4 + $0x50] sm:$0xff]
    %v233 = vld [vmem:[#allocation4 + $0x58] sm:$0xff]
    %v234 = vld [vmem:[#allocation4 + $0x60] sm:$0xff]
    %v235 = vld [vmem:[#allocation4 + $0x68] sm:$0xff]
    %v236 = vld [vmem:[#allocation4 + $0x70] sm:$0xff]
    %v237 = vld [vmem:[#allocation4 + $0x78] sm:$0xff]
    %v238 = vld [vmem:[%s5] sm:$0x1]
    %v240 = vlaneseq
    %v241 = vshrl.u32 %v240, 7
    %v242 = vsub.s32 0, %v241
    %v243 = vrot.slane %v238, %v242
    %245 = vmatprep.subr.mxu0 0.0
    %246 = vmatpush1.msra.mxu0 %v222
    %247 = vmatprep.subr.mxu0 0.0
    %248 = vmatpush1.msra.mxu0 %v223
    %249 = vmatprep.subr.mxu0 0.0
    %250 = vmatpush1.msra.mxu0 %v224
    %251 = vmatprep.subr.mxu0 0.0
    %252 = vmatpush1.msra.mxu0 %v225
    %253 = vmatprep.subr.mxu0 0.0
    %254 = vmatpush1.msra.mxu0 %v226
    %255 = vmatprep.subr.mxu0 0.0
    %256 = vmatpush1.msra.mxu0 %v227
    %257 = vmatprep.subr.mxu0 0.0
    %258 = vmatpush1.msra.mxu0 %v228
    %259 = vmatprep.subr.mxu0 0.0
    %260 = vmatpush1.msra.mxu0 %v229
    %261 = vmatprep.subr.mxu0 0.0
    %262 = vmatpush1.msra.mxu0 %v230
    %263 = vmatprep.subr.mxu0 0.0
    %264 = vmatpush1.msra.mxu0 %v231
    %265 = vmatprep.subr.mxu0 0.0
    %266 = vmatpush1.msra.mxu0 %v232
    %267 = vmatprep.subr.mxu0 0.0
    %268 = vmatpush1.msra.mxu0 %v233
    %269 = vmatprep.subr.mxu0 0.0
    %270 = vmatpush1.msra.mxu0 %v234
    %271 = vmatprep.subr.mxu0 0.0
    %272 = vmatpush1.msra.mxu0 %v235
    %273 = vmatprep.subr.mxu0 0.0
    %274 = vmatpush1.msra.mxu0 %v236
    %275 = vmatprep.subr.mxu0 0.0
    %276 = vmatpush1.msra.mxu0 %v237
    %277 = vmatprep.subr.mxu0 0.0
    %278 = vmatpush1.msra.mxu0 0.0
    %279 = vmatprep.subr.mxu0 0.0
    %280 = vmatpush1.msra.mxu0 0.0
    %281 = vmatprep.subr.mxu0 0.0
    %282 = vmatpush1.msra.mxu0 0.0
    %283 = vmatprep.subr.mxu0 0.0
    %284 = vmatpush1.msra.mxu0 0.0
    %285 = vmatprep.subr.mxu0 0.0
    %286 = vmatpush1.msra.mxu0 0.0
    %287 = vmatprep.subr.mxu0 0.0
    %288 = vmatpush1.msra.mxu0 0.0
    %289 = vmatprep.subr.mxu0 0.0
    %290 = vmatpush1.msra.mxu0 0.0
    %291 = vmatprep.subr.mxu0 0.0
    %292 = vmatpush1.msra.mxu0 0.0
    %293 = vmatprep.subr.mxu0 0.0
    %294 = vmatpush1.msra.mxu0 0.0
    %295 = vmatprep.subr.mxu0 0.0
    %296 = vmatpush1.msra.mxu0 0.0
    %297 = vmatprep.subr.mxu0 0.0
    %298 = vmatpush1.msra.mxu0 0.0
    %299 = vmatprep.subr.mxu0 0.0
    %300 = vmatpush1.msra.mxu0 0.0
    %301 = vmatprep.subr.mxu0 0.0
    %302 = vmatpush1.msra.mxu0 0.0
    %303 = vmatprep.subr.mxu0 0.0
    %304 = vmatpush1.msra.mxu0 0.0
    %305 = vmatprep.subr.mxu0 0.0
    %306 = vmatpush1.msra.mxu0 0.0
    %307 = vmatprep.subr.mxu0 0.0
    %308 = vmatpush1.msra.mxu0 0.0
    %309 = vmatprep.mubr.f32.mxu0 0.0
    %310 = vmatmul.mubr.f32.gmra.mrb[0].mxu0 %v221
    %v311 = vpop.f32.mrb[0].mxu0
    %v312 = vadd.f32 %v243, %v311
    %v313 = vpop.f32.mrb[0].mxu0
    %314 = vdwg.mxu0
    %315 = vst [vmem:[%s6] sm:$0xff] %v312
    // Predicated region
    $region34: #{dqn_forward.1} parent=1 // pred_check
      _
    $region35: #{dqn_forward.1} parent=1 // pred_check_branch
      %317 = sbr.rel (0) target = $region37
    $region36: #{dqn_forward.1} parent=1 // pred_region
      _
    $region37: #{dqn_forward.1} parent=1 // pred_fallthru
      _
    // Predicated region
    $region38: #{dqn_forward.1} parent=1 // pred_check
      _
    $region39: #{dqn_forward.1} parent=1 // pred_check_branch
      %319 = sbr.rel (0) target = $region41
    $region40: #{dqn_forward.1} parent=1 // pred_region
      _
    $region41: #{dqn_forward.1} parent=1 // pred_fallthru
      _
    %320 = vsyncpa [#allocation3], 1
    %321 = vsyncpa [#allocation5], 1

</llo_original>
